<compile_context>
chip_gen: v5e
topology: v5e:2x2
jax: 0.10.0
libtpu: 0.0.40
codegen_flags: <defaults>
</compile_context>

<pallas_src>
import functools

import jax
import jax.numpy as jnp
from jax.experimental import pallas as pl
from jax.experimental.pallas import tpu as pltpu


def _round_up(x, m):
    return (x + m - 1) // m * m


def _cdiv(a, b):
    return (a + b - 1) // b


def _le_supcon_kernel(labels_ref, feat_ref, emb_t_ref, loss_ref,
                      m_sc, l_sc, pos_sc, *,
                      inv_temp, n_class, c_pad, block_b, block_c, batch_size,
                      use_highest_precision):
    # labels_ref: [block_b, 1]  int32    (VMEM, constant over the class grid axis)
    # feat_ref:   [block_b, D]  f32/bf16 (VMEM, constant over the class grid axis)
    # emb_t_ref:  [D, block_c]  f32/bf16 (VMEM, streamed over the class grid axis)
    # loss_ref:   [1, 1]        f32      (SMEM, per-batch-block partial loss sum)
    # m_sc/l_sc/pos_sc: [block_b, 1] f32 VMEM scratch (online-LSE state)
    j = pl.program_id(1)
    last_j = pl.num_programs(1) - 1

    @pl.when(j == 0)
    def _init():
        m_sc[...] = jnp.full_like(m_sc, -jnp.inf)
        l_sc[...] = jnp.zeros_like(l_sc)
        pos_sc[...] = jnp.zeros_like(pos_sc)
        loss_ref[0, 0] = jnp.float32(0.0)

    feat = feat_ref[...]
    emb_t = emb_t_ref[...]

    # MXU matmul with f32 accumulation; 1/temp folded into a single VPU multiply.
    if use_highest_precision:
        logits = jnp.dot(feat, emb_t, preferred_element_type=jnp.float32,
                         precision=jax.lax.Precision.HIGHEST)
    else:
        logits = jnp.dot(feat, emb_t, preferred_element_type=jnp.float32)
    logits = logits * inv_temp                                    # [block_b, block_c]

    # Class ids for this tile as a single [1, block_c] row (no full-tile iota).
    col_ids = j * block_c + jax.lax.broadcasted_iota(jnp.int32, (1, block_c), 1)

    if c_pad != n_class:
        # Padded class columns (zero embedding -> logit 0) must not contribute to
        # the denominator: additive bias row instead of a full-tile compare+select.
        logits = logits + jnp.where(col_ids < n_class, 0.0, -1e30).astype(jnp.float32)

    # pos_logit_i accumulates logits[i, label_i]; the label hits exactly one column
    # across all class tiles, so a masked per-tile sum is exact.
    # (Out-of-range labels would silently contribute 0 — inputs must satisfy
    #  0 <= label < n_class, as in the PyTorch reference.)
    labels = labels_ref[...]                                      # [block_b, 1]
    pos_sc[...] += jnp.sum(jnp.where(col_ids == labels, logits, 0.0),
                           axis=-1, keepdims=True)

    # Online (flash-style) logsumexp update across class tiles.  Kept in f32
    # (v5e has no bf16 VPU/EUP; exp(x - m) <= 1 so the f32 sum stays accurate).
    m_prev = m_sc[...]
    m_new = jnp.maximum(m_prev, jnp.max(logits, axis=-1, keepdims=True))
    l_sc[...] = (jnp.exp(m_prev - m_new) * l_sc[...]
                 + jnp.sum(jnp.exp(logits - m_new), axis=-1, keepdims=True))
    m_sc[...] = m_new

    @pl.when(j == last_j)
    def _finalize():
        lse = m_sc[...] + jnp.log(l_sc[...])
        per_row = lse - pos_sc[...]                               # [block_b, 1]
        if batch_size % block_b != 0:
            # Ragged batch tail (no wrapper-side padding): zero those rows' loss.
            # Garbage (even NaN) in unselected rows does not propagate through where().
            row_ids = (pl.program_id(0) * block_b
                       + jax.lax.broadcasted_iota(jnp.int32, (block_b, 1), 0))
            per_row = jnp.where(row_ids < batch_size, per_row, 0.0)
        loss_ref[0, 0] = jnp.sum(per_row)


def le_supcon_loss(batch_feature_emb, batch_label, label_emb, *, temp):
    """Pallas implementation of LE_SupCon.forward.

    batch_feature_emb: [B, D] float32/bfloat16
    batch_label:       [B]    int   (values in [0, n_class))
    label_emb:         [C, D] float32/bfloat16  (C == n_class)
    """
    B, D = batch_feature_emb.shape
    C, D2 = label_emb.shape
    assert D == D2

    in_dtype = batch_feature_emb.dtype
    compute_dtype = in_dtype if in_dtype in (jnp.bfloat16, jnp.float32) else jnp.float32
    itemsize = jnp.dtype(compute_dtype).itemsize

    # ---- generation-aware VMEM budget --------------------------------------
    try:
        vmem_cap = int(pltpu.get_tpu_info().vmem_capacity_bytes)
    except Exception:
        vmem_cap = 64 * 1024 * 1024          # conservative (v7x-sized) fallback
    budget = int(vmem_cap * 0.85)            # headroom for Mosaic internal scratch
    usable = int(budget * 0.90)              # headroom inside our own estimate
    row_cap = 2048 if vmem_cap >= 96 * 1024 * 1024 else 1024   # v5e/v6e vs v7x

    # ---- class tiling -------------------------------------------------------
    # Single resident [D, c_pad] tile when it fits comfortably; otherwise stream
    # lane-dense (multiple-of-128) class tiles through the online logsumexp.
    c_pad0 = max(128, _round_up(C, 128))
    emb_budget = usable // 3
    if 2 * D * c_pad0 * itemsize <= emb_budget:
        block_c = c_pad0
    else:
        block_c = (emb_budget // max(2 * D * itemsize, 1)) // 128 * 128
        block_c = int(max(128, min(block_c, c_pad0)))
    c_pad = _round_up(C, block_c)
    gc = c_pad // block_c

    # ---- batch tiling: solve block_b from the full VMEM footprint -----------
    emb_bytes = 2 * D * block_c * itemsize            # class tiles (double-buffered)
    per_row_bytes = (2 * D * itemsize                 # feat (double-buffered)
                     + 2 * 4                          # labels (double-buffered i32)
                     + 5 * block_c * 4                # f32 logits/exp/mask temporaries
                     + 3 * 4)                         # m/l/pos scratch
    block_b = (usable - emb_bytes) // per_row_bytes
    block_b = int(max(8, min(row_cap, (block_b // 8) * 8)))
    block_b = min(block_b, _round_up(B, 8))
    gb = _cdiv(B, block_b)

    # ---- operands (NO batch padding: the ragged tail is masked in-kernel) ---
    feat = batch_feature_emb.astype(compute_dtype)               # [B, D]
    labels = batch_label.astype(jnp.int32).reshape(B, 1)         # [B, 1]
    lab_emb_t = jnp.transpose(label_emb.astype(compute_dtype))   # [D, C] (small)
    if c_pad != C:
        lab_emb_t = jnp.pad(lab_emb_t, ((0, 0), (0, c_pad - C)))  # zero class pad

    est_vmem = emb_bytes + block_b * per_row_bytes
    vmem_limit = int(min(budget, max(32 * 1024 * 1024, int(est_vmem * 1.5))))

    kernel = functools.partial(
        _le_supcon_kernel, inv_temp=1.0 / float(temp), n_class=C, c_pad=c_pad,
        block_b=block_b, block_c=block_c, batch_size=B,
        use_highest_precision=(compute_dtype == jnp.float32))

    # TODO(synk): when gc == 1 the embedding spec is grid-invariant; once
    # pipeline_mode=pl.Buffered(1) is verified on the target jax build, single-buffer
    # it to reclaim D*block_c*itemsize of dead VMEM.
    partial_sums = pl.pallas_call(
        kernel,
        out_shape=jax.ShapeDtypeStruct((gb, 1), jnp.float32),
        grid=(gb, gc),
        in_specs=[
            pl.BlockSpec((block_b, 1), lambda i, j: (i, 0)),   # labels (batch-tiled)
            pl.BlockSpec((block_b, D), lambda i, j: (i, 0)),   # feat   (batch-tiled)
            pl.BlockSpec((D, block_c), lambda i, j: (0, j)),   # emb^T  (class-tiled)
        ],
        out_specs=pl.BlockSpec((1, 1), lambda i, j: (i, 0),
                               memory_space=pltpu.MemorySpace.SMEM),
        scratch_shapes=[pltpu.VMEM((block_b, 1), jnp.float32),   # running max
                        pltpu.VMEM((block_b, 1), jnp.float32),   # running exp-sum
                        pltpu.VMEM((block_b, 1), jnp.float32)],  # positive logit
        compiler_params=pltpu.CompilerParams(
            dimension_semantics=("parallel", "arbitrary"),
            vmem_limit_bytes=vmem_limit),
    )(labels, feat, lab_emb_t)

    # Tiny [gb] reduction + mean over the *true* batch size in plain JAX.
    return jnp.sum(partial_sums) / B


def _reference_loss(batch_feature_emb, batch_label, label_emb, *, temp):
    """Pure-JAX mirror of the PyTorch forward, for verification."""
    batch_label_emb = label_emb[batch_label]                               # [B, D]
    numerator = jnp.exp(jnp.sum(batch_feature_emb * batch_label_emb / temp, axis=-1))
    logits = jnp.sum(
        batch_feature_emb[:, None, :] * label_emb[None, :, :] / temp, axis=-1
    )                                                                      # [B, C]
    denominator = jnp.sum(jnp.exp(logits), axis=-1)                        # [B]
    log_prob = -jnp.log(numerator / denominator)
    return jnp.mean(log_prob)


if __name__ == "__main__":
    temp = 0.5
    n_class = 4
    B, D = 8, 32

    key = jax.random.PRNGKey(0)
    k_feat, k_lab, k_emb = jax.random.split(key, 3)

    batch_feature_emb = jax.random.normal(k_feat, (B, D), dtype=jnp.float32)
    batch_label = jax.random.randint(k_lab, (B,), 0, n_class, dtype=jnp.int32)
    label_emb = jax.random.normal(k_emb, (n_class, D), dtype=jnp.float32)

    loss = le_supcon_loss(batch_feature_emb, batch_label, label_emb, temp=temp)
    loss = jax.block_until_ready(loss)

    ref = _reference_loss(batch_feature_emb, batch_label, label_emb, temp=temp)
    assert jnp.allclose(loss, ref, rtol=1e-5, atol=1e-5), (loss, ref)

    print("KERNEL_OK")
</pallas_src>

<mosaic_0001>
module attributes {stable_mosaic.version = 11 : i64} {
  func.func @_le_supcon_kernel(%arg0: i32, %arg1: i32, %arg2: memref<8x1xi32, #tpu.memory_space<vmem>>, %arg3: memref<8x32xf32, #tpu.memory_space<vmem>>, %arg4: memref<32x128xf32, #tpu.memory_space<vmem>>, %arg5: memref<1x1xf32, #tpu.memory_space<smem>>, %arg6: memref<8x1xf32, #tpu.memory_space<vmem>>, %arg7: memref<8x1xf32, #tpu.memory_space<vmem>>, %arg8: memref<8x1xf32, #tpu.memory_space<vmem>>) attributes {dimension_semantics = [#tpu.dimension_semantics<parallel>, #tpu.dimension_semantics<arbitrary>], iteration_bounds = array<i64: 1, 1>, scalar_prefetch = 0 : i64, scratch_operands = 3 : i64, tpu.core_type = #tpu.core_type<tc>, window_params = [{transform_indices = @transform_0, window_bounds = array<i64: 8, 1>}, {transform_indices = @transform_1, window_bounds = array<i64: 8, 32>}, {transform_indices = @transform_2, window_bounds = array<i64: 32, 128>}, {transform_indices = @transform_3, window_bounds = array<i64: 1, 1>}]} {
    %c0_i32 = arith.constant 0 : i32
    %0 = arith.cmpi eq, %arg1, %c0_i32 : i32
    %1 = arith.extui %0 : i1 to i32
    %c0_i32_0 = arith.constant 0 : i32
    %2 = arith.cmpi ne, %1, %c0_i32_0 : i32
    scf.if %2 {
      %cst_27 = arith.constant 0xFF800000 : f32
      %49 = vector.broadcast %cst_27 : f32 to vector<8x1xf32>
      %c0_28 = arith.constant 0 : index
      %c0_29 = arith.constant 0 : index
      %50 = vector.load %arg6[%c0_28, %c0_29] : memref<8x1xf32, #tpu.memory_space<vmem>>, vector<8x1xf32>
      tpu.vector_store %arg6[%c0_28, %c0_29], %49 {strides = array<i32>} : memref<8x1xf32, #tpu.memory_space<vmem>>, vector<8x1xf32>,
      %cst_30 = arith.constant 0.000000e+00 : f32
      %51 = vector.broadcast %cst_30 : f32 to vector<8x1xf32>
      %c0_31 = arith.constant 0 : index
      %c0_32 = arith.constant 0 : index
      %52 = vector.load %arg7[%c0_31, %c0_32] : memref<8x1xf32, #tpu.memory_space<vmem>>, vector<8x1xf32>
      tpu.vector_store %arg7[%c0_31, %c0_32], %51 {strides = array<i32>} : memref<8x1xf32, #tpu.memory_space<vmem>>, vector<8x1xf32>,
      %cst_33 = arith.constant 0.000000e+00 : f32
      %53 = vector.broadcast %cst_33 : f32 to vector<8x1xf32>
      %c0_34 = arith.constant 0 : index
      %c0_35 = arith.constant 0 : index
      %54 = vector.load %arg8[%c0_34, %c0_35] : memref<8x1xf32, #tpu.memory_space<vmem>>, vector<8x1xf32>
      tpu.vector_store %arg8[%c0_34, %c0_35], %53 {strides = array<i32>} : memref<8x1xf32, #tpu.memory_space<vmem>>, vector<8x1xf32>,
      %cst_36 = arith.constant 0.000000e+00 : f32
      %c0_37 = arith.constant 0 : index
      %c0_38 = arith.constant 0 : index
      %55 = memref.load %arg5[%c0_37, %c0_38] : memref<1x1xf32, #tpu.memory_space<smem>>
      memref.store %cst_36, %arg5[%c0_37, %c0_38] : memref<1x1xf32, #tpu.memory_space<smem>>
    } else {
    }
    %c0 = arith.constant 0 : index
    %c0_1 = arith.constant 0 : index
    %3 = vector.load %arg3[%c0, %c0_1] : memref<8x32xf32, #tpu.memory_space<vmem>>, vector<8x32xf32>
    %c0_2 = arith.constant 0 : index
    %c0_3 = arith.constant 0 : index
    %4 = vector.load %arg4[%c0_2, %c0_3] : memref<32x128xf32, #tpu.memory_space<vmem>>, vector<32x128xf32>
    %cst = arith.constant dense<0.000000e+00> : vector<8x128xf32>
    %5 = tpu.matmul %3, %4, %cst {dimension_numbers = #tpu.dot_dimension_numbers<[1], [0], [0], [1], [0, 0, 1, 1], [], []>, precision = #tpu.contract_precision<fp32>} : vector<8x32xf32>, vector<32x128xf32>, vector<8x128xf32> -> vector<8x128xf32>
    %cst_4 = arith.constant 2.000000e+00 : f32
    %6 = vector.broadcast %cst_4 : f32 to vector<8x128xf32>
    %7 = arith.mulf %5, %6 : vector<8x128xf32>
    %c128_i32 = arith.constant 128 : i32
    %8 = arith.muli %arg1, %c128_i32 : i32
    %9 = tpu.iota {dimensions = array<i32: 1>} : vector<1x128xi32>
    %10 = vector.broadcast %8 : i32 to vector<1x128xi32>
    %11 = arith.addi %10, %9 : vector<1x128xi32>
    %c4_i32 = arith.constant 4 : i32
    %12 = vector.broadcast %c4_i32 : i32 to vector<1x128xi32>
    %13 = arith.cmpi slt, %11, %12 : vector<1x128xi32>
    %cst_5 = arith.constant 0.000000e+00 : f32
    %cst_6 = arith.constant -1.000000e+30 : f32
    %14 = vector.broadcast %cst_5 : f32 to vector<1x128xf32>
    %15 = vector.broadcast %cst_6 : f32 to vector<1x128xf32>
    %16 = arith.select %13, %14, %15 : vector<1x128xi1>, vector<1x128xf32>
    %17 = vector.broadcast %16 : vector<1x128xf32> to vector<8x128xf32>
    %18 = arith.addf %7, %17 : vector<8x128xf32>
    %c0_7 = arith.constant 0 : index
    %c0_8 = arith.constant 0 : index
    %19 = vector.load %arg2[%c0_7, %c0_8] : memref<8x1xi32, #tpu.memory_space<vmem>>, vector<8x1xi32>
    %c0_9 = arith.constant 0 : index
    %c0_10 = arith.constant 0 : index
    %20 = vector.load %arg8[%c0_9, %c0_10] : memref<8x1xf32, #tpu.memory_space<vmem>>, vector<8x1xf32>
    %21 = vector.broadcast %11 : vector<1x128xi32> to vector<8x128xi32>
    %22 = vector.broadcast %19 : vector<8x1xi32> to vector<8x128xi32>
    %23 = arith.cmpi eq, %21, %22 : vector<8x128xi32>
    %cst_11 = arith.constant 0.000000e+00 : f32
    %24 = vector.broadcast %cst_11 : f32 to vector<8x128xf32>
    %25 = arith.select %23, %18, %24 : vector<8x128xi1>, vector<8x128xf32>
    %cst_12 = arith.constant dense<0.000000e+00> : vector<8xf32>
    %26 = vector.multi_reduction <add>, %25, %cst_12 [1] : vector<8x128xf32> to vector<8xf32>
    %27 = vector.shape_cast %26 : vector<8xf32> to vector<8x1xf32>
    %28 = arith.addf %20, %27 : vector<8x1xf32>
    %c0_13 = arith.constant 0 : index
    %c0_14 = arith.constant 0 : index
    %29 = vector.load %arg8[%c0_13, %c0_14] : memref<8x1xf32, #tpu.memory_space<vmem>>, vector<8x1xf32>
    tpu.vector_store %arg8[%c0_13, %c0_14], %28 {strides = array<i32>} : memref<8x1xf32, #tpu.memory_space<vmem>>, vector<8x1xf32>,
    %c0_15 = arith.constant 0 : index
    %c0_16 = arith.constant 0 : index
    %30 = vector.load %arg6[%c0_15, %c0_16] : memref<8x1xf32, #tpu.memory_space<vmem>>, vector<8x1xf32>
    %cst_17 = arith.constant dense<0xFF800000> : vector<8xf32>
    %31 = vector.multi_reduction <maximumf>, %18, %cst_17 [1] : vector<8x128xf32> to vector<8xf32>
    %32 = vector.shape_cast %31 : vector<8xf32> to vector<8x1xf32>
    %33 = arith.maximumf %30, %32 : vector<8x1xf32>
    %34 = arith.subf %30, %33 : vector<8x1xf32>
    %35 = math.exp %34 : vector<8x1xf32>
    %c0_18 = arith.constant 0 : index
    %c0_19 = arith.constant 0 : index
    %36 = vector.load %arg7[%c0_18, %c0_19] : memref<8x1xf32, #tpu.memory_space<vmem>>, vector<8x1xf32>
    %37 = arith.mulf %35, %36 : vector<8x1xf32>
    %38 = vector.broadcast %33 : vector<8x1xf32> to vector<8x128xf32>
    %39 = arith.subf %18, %38 : vector<8x128xf32>
    %40 = math.exp %39 : vector<8x128xf32>
    %cst_20 = arith.constant dense<0.000000e+00> : vector<8xf32>
    %41 = vector.multi_reduction <add>, %40, %cst_20 [1] : vector<8x128xf32> to vector<8xf32>
    %42 = vector.shape_cast %41 : vector<8xf32> to vector<8x1xf32>
    %43 = arith.addf %37, %42 : vector<8x1xf32>
    %c0_21 = arith.constant 0 : index
    %c0_22 = arith.constant 0 : index
    %44 = vector.load %arg7[%c0_21, %c0_22] : memref<8x1xf32, #tpu.memory_space<vmem>>, vector<8x1xf32>
    tpu.vector_store %arg7[%c0_21, %c0_22], %43 {strides = array<i32>} : memref<8x1xf32, #tpu.memory_space<vmem>>, vector<8x1xf32>,
    %c0_23 = arith.constant 0 : index
    %c0_24 = arith.constant 0 : index
    %45 = vector.load %arg6[%c0_23, %c0_24] : memref<8x1xf32, #tpu.memory_space<vmem>>, vector<8x1xf32>
    tpu.vector_store %arg6[%c0_23, %c0_24], %33 {strides = array<i32>} : memref<8x1xf32, #tpu.memory_space<vmem>>, vector<8x1xf32>,
    %c0_i32_25 = arith.constant 0 : i32
    %46 = arith.cmpi eq, %arg1, %c0_i32_25 : i32
    %47 = arith.extui %46 : i1 to i32
    %c0_i32_26 = arith.constant 0 : i32
    %48 = arith.cmpi ne, %47, %c0_i32_26 : i32
    scf.if %48 {
      %c0_27 = arith.constant 0 : index
      %c0_28 = arith.constant 0 : index
      %49 = vector.load %arg6[%c0_27, %c0_28] : memref<8x1xf32, #tpu.memory_space<vmem>>, vector<8x1xf32>
      %c0_29 = arith.constant 0 : index
      %c0_30 = arith.constant 0 : index
      %50 = vector.load %arg7[%c0_29, %c0_30] : memref<8x1xf32, #tpu.memory_space<vmem>>, vector<8x1xf32>
      %51 = math.log %50 : vector<8x1xf32>
      %52 = arith.addf %49, %51 : vector<8x1xf32>
      %c0_31 = arith.constant 0 : index
      %c0_32 = arith.constant 0 : index
      %53 = vector.load %arg8[%c0_31, %c0_32] : memref<8x1xf32, #tpu.memory_space<vmem>>, vector<8x1xf32>
      %54 = arith.subf %52, %53 : vector<8x1xf32>
      %55 = vector.shape_cast %54 : vector<8x1xf32> to vector<1x8x1xf32>
      %cst_33 = arith.constant dense<0.000000e+00> : vector<1xf32>
      %56 = vector.multi_reduction <add>, %55, %cst_33 [1, 2] : vector<1x8x1xf32> to vector<1xf32>
      %57 = vector.shape_cast %56 : vector<1xf32> to vector<1x1x1xf32>
      %58 = vector.extract %57[0, 0, 0] : f32 from vector<1x1x1xf32>
      %c0_34 = arith.constant 0 : index
      %c0_35 = arith.constant 0 : index
      %59 = memref.load %arg5[%c0_34, %c0_35] : memref<1x1xf32, #tpu.memory_space<smem>>
      memref.store %58, %arg5[%c0_34, %c0_35] : memref<1x1xf32, #tpu.memory_space<smem>>
    } else {
    }
    return
  }
  func.func @transform_0(%arg0: i32, %arg1: i32) -> (i32, i32) {
    %c0_i32 = arith.constant 0 : i32
    %c0_i32_0 = arith.constant 0 : i32
    return %arg0, %c0_i32 : i32, i32
  }
  func.func @transform_1(%arg0: i32, %arg1: i32) -> (i32, i32) {
    %c0_i32 = arith.constant 0 : i32
    %c0_i32_0 = arith.constant 0 : i32
    return %arg0, %c0_i32 : i32, i32
  }
  func.func @transform_2(%arg0: i32, %arg1: i32) -> (i32, i32) {
    %c0_i32 = arith.constant 0 : i32
    %c0_i32_0 = arith.constant 0 : i32
    return %c0_i32, %arg1 : i32, i32
  }
  func.func @transform_3(%arg0: i32, %arg1: i32) -> (i32, i32) {
    %c0_i32 = arith.constant 0 : i32
    %c0_i32_0 = arith.constant 0 : i32
    return %arg0, %c0_i32 : i32, i32
  }
}

</mosaic_0001>

<llo_original>
// kernel: tpu_custom_call.1
$region0: #{tpu_custom_call.1}
  #allocation0 [shape = 'u32[]', space=smem, size = 0x4, offset = 0x4, fixed_abs, tag = 'smem constant byte address 0x4 - core index']
  #allocation1 [shape = 'u32[72,128]{1,0:T(1,128)}', space=vmem, size = 0x9000, scoped, tag = 'internal scratch']
  #allocation2 [shape = 'f32[8,1]{1,0:T(8,128)}', space=vmem, size = 0x1000, scoped, tag = 'scratch operand']
  #allocation3 [shape = 'f32[8,1]{1,0:T(8,128)}', space=vmem, size = 0x1000, scoped, tag = 'scratch operand']
  #allocation4 [shape = 'f32[8,1]{1,0:T(8,128)}', space=vmem, size = 0x1000, scoped, tag = 'scratch operand']
  %s0 = inlined_call_operand.vmem [shape: s32[8,1], index: 0, kind: input, shape index: {}]
  %s1 = inlined_call_operand.vmem [shape: f32[8,32], index: 1, kind: input, shape index: {}]
  %s2 = inlined_call_operand.hbm [shape: f32[32,128], index: 2, kind: input, shape index: {}]
  %s3 = inlined_call_operand.hbm [shape: f32[1,1], index: 3, kind: output, shape index: {}]
  %s4 = sld [smem:[#allocation0]]
  $region34: #{tpu_custom_call.1} parent=0
    _
  %s6 = ssub.s32 1, %s4
  %s7 = scalar_select 0, %s6, %s4
  $region1: #{tpu_custom_call.1} parent=0
    #allocation5 [shape = 'u8[16384]{0}', space=vmem, size = 0x4000, scoped, tag = 'input window, operand 2, single buffered']
    #allocation6 [shape = 's32[1]{0}', space=sflag, size = 0x4, scoped, tag = 'scoped memory for tpu_custom_call.1']
    #allocation7 [shape = 's32[1]{0}', space=sflag, size = 0x4, scoped, tag = 'scoped memory for tpu_custom_call.1']
    #allocation8 [shape = 'u8[512]{0}', space=smem, size = 0x200, scoped, tag = 'output window, operand 0, single buffered']
    %8 = vsyncpa [#allocation6], 0
    %9 = vsyncpa [#allocation7], 0
    // Predicated region
    $region2: #{tpu_custom_call.1} parent=1 // pred_check
      _
    $region3: #{tpu_custom_call.1} parent=1 // pred_check_branch
      %11 = sbr.rel (0) target = $region5
    $region4: #{tpu_custom_call.1} parent=1 // pred_region
      _
    $region5: #{tpu_custom_call.1} parent=1 // pred_fallthru
      _
    // Predicated region
    $region6: #{tpu_custom_call.1} parent=1 // pred_check
      _
    $region7: #{tpu_custom_call.1} parent=1 // pred_check_branch
      %13 = sbr.rel (0) target = $region9
    $region8: #{tpu_custom_call.1} parent=1 // pred_region
      _
    $region9: #{tpu_custom_call.1} parent=1 // pred_fallthru
      _
    // Predicated region
    $region10: #{tpu_custom_call.1} parent=1 // pred_check
      _
    $region11: #{tpu_custom_call.1} parent=1 // pred_check_branch
      %15 = sbr.rel (0) target = $region13
    $region12: #{tpu_custom_call.1} parent=1 // pred_region
      %17 = vsyncadd [#allocation6], 0
      %s18 = sshll.u32 %s2, 4
      %s19 = int_to_ptr.hbm [resolvable:$true] %s18
      %s20 = sshll.u32 [#allocation5], 4
      %s21 = int_to_ptr.vmem [resolvable:$true] %s20
      %26 = dma.hbm_to_vmem [thread:$0]  %s19, 512, %s21, [#allocation6], 128, 128, 8
    $region13: #{tpu_custom_call.1} parent=1 // pred_fallthru
      _
    // Predicated region
    $region14: #{tpu_custom_call.1} parent=1 // pred_check
      _
    $region15: #{tpu_custom_call.1} parent=1 // pred_check_branch
      %28 = sbr.rel (0) target = $region17
    $region16: #{tpu_custom_call.1} parent=1 // pred_region
      %30 = dma.done [#allocation6], 512
    $region17: #{tpu_custom_call.1} parent=1 // pred_fallthru
      _
    %p31 = scmp.eq.s32.totalorder 0, 0
    // Predicated region
    $region18: #{tpu_custom_call.1} parent=1 // pred_check
      %p32 = pneg %p31
    $region19: #{tpu_custom_call.1} parent=1 // pred_check_branch
      %34 = sbr.rel (%p32) target = $region21
    $region20: #{tpu_custom_call.1} parent=1 // pred_region
      %vm35 = vcmask 7168
      %36 = vst.msk [vmem:[#allocation2] sm:$0xff] %vm35, -inf
      %37 = vst.msk [vmem:[#allocation3] sm:$0xff] %vm35, 0.0
      %38 = vst.msk [vmem:[#allocation4] sm:$0xff] %vm35, 0.0
      %s39 = scalar_lea.smem [#allocation8], 0
      %40 = sst [smem:[%s39]] 0.0
    $region21: #{tpu_custom_call.1} parent=1 // pred_fallthru
      _
    %v41 = vld [vmem:[%s1] sm:$0xff]
    %v42 = vld [vmem:[#allocation5] sm:$0xff]
    %v43 = vld [vmem:[#allocation5 + $0x8] sm:$0xff]
    %v44 = vld [vmem:[#allocation5 + $0x10] sm:$0xff]
    %v45 = vld [vmem:[#allocation5 + $0x18] sm:$0xff]
    %vm46 = vcmask 261120
    %v48 = vsel %vm46, %v41, 0
    %50 = vmatpush.msra.mxu0 0.0
    %51 = vmatpush.msra.mxu0 0.0
    %52 = vmatpush.msra.mxu0 0.0
    %53 = vmatpush.msra.mxu0 0.0
    %54 = vmatpush.msra.mxu0 0.0
    %55 = vmatpush.msra.mxu0 0.0
    %56 = vmatpush.msra.mxu0 0.0
    %57 = vmatpush.msra.mxu0 0.0
    %58 = vmatpush.msra.mxu0 0.0
    %59 = vmatpush.msra.mxu0 0.0
    %60 = vmatpush.msra.mxu0 0.0
    %61 = vmatpush.msra.mxu0 0.0
    %v62 = vand.u32 %v45, 4294901760
    %63 = vmatpush.msra.mxu0 %v62
    %v64 = vand.u32 %v44, 4294901760
    %65 = vmatpush.msra.mxu0 %v64
    %v66 = vand.u32 %v43, 4294901760
    %67 = vmatpush.msra.mxu0 %v66
    %v68 = vand.u32 %v42, 4294901760
    %69 = vmatpush.msra.mxu0 %v68
    %v70 = vand.u32 %v48, 4294901760
    %v71 = vsub.f32 %v48, %v70
    %v72 = vand.u32 %v71, 4294901760
    %v73 = vsub.f32 %v71, %v72
    %v74 = vand.u32 %v73, 4294901760
    %75 = vmatmul.f32.gmra.mxu0 %v74
    %v76 = vpop.f32.mrf.mxu0
    %v77 = vadd.f32 0.0, %v76
    %78 = vdwg.mxu0
    %79 = vmatpush.msra.mxu0 0.0
    %80 = vmatpush.msra.mxu0 0.0
    %81 = vmatpush.msra.mxu0 0.0
    %82 = vmatpush.msra.mxu0 0.0
    %83 = vmatpush.msra.mxu0 0.0
    %84 = vmatpush.msra.mxu0 0.0
    %85 = vmatpush.msra.mxu0 0.0
    %86 = vmatpush.msra.mxu0 0.0
    %87 = vmatpush.msra.mxu0 0.0
    %88 = vmatpush.msra.mxu0 0.0
    %89 = vmatpush.msra.mxu0 0.0
    %90 = vmatpush.msra.mxu0 0.0
    %v91 = vand.u32 %v45, 4294901760
    %v92 = vsub.f32 %v45, %v91
    %v93 = vand.u32 %v92, 4294901760
    %v94 = vsub.f32 %v92, %v93
    %v95 = vand.u32 %v94, 4294901760
    %96 = vmatpush.msra.mxu0 %v95
    %v97 = vand.u32 %v44, 4294901760
    %v98 = vsub.f32 %v44, %v97
    %v99 = vand.u32 %v98, 4294901760
    %v100 = vsub.f32 %v98, %v99
    %v101 = vand.u32 %v100, 4294901760
    %102 = vmatpush.msra.mxu0 %v101
    %v103 = vand.u32 %v43, 4294901760
    %v104 = vsub.f32 %v43, %v103
    %v105 = vand.u32 %v104, 4294901760
    %v106 = vsub.f32 %v104, %v105
    %v107 = vand.u32 %v106, 4294901760
    %108 = vmatpush.msra.mxu0 %v107
    %v109 = vand.u32 %v42, 4294901760
    %v110 = vsub.f32 %v42, %v109
    %v111 = vand.u32 %v110, 4294901760
    %v112 = vsub.f32 %v110, %v111
    %v113 = vand.u32 %v112, 4294901760
    %114 = vmatpush.msra.mxu0 %v113
    %v115 = vand.u32 %v48, 4294901760
    %116 = vmatmul.f32.gmra.mxu0 %v115
    %v117 = vpop.f32.mrf.mxu0
    %v118 = vadd.f32 %v77, %v117
    %119 = vdwg.mxu0
    %120 = vmatpush.msra.mxu0 0.0
    %121 = vmatpush.msra.mxu0 0.0
    %122 = vmatpush.msra.mxu0 0.0
    %123 = vmatpush.msra.mxu0 0.0
    %124 = vmatpush.msra.mxu0 0.0
    %125 = vmatpush.msra.mxu0 0.0
    %126 = vmatpush.msra.mxu0 0.0
    %127 = vmatpush.msra.mxu0 0.0
    %128 = vmatpush.msra.mxu0 0.0
    %129 = vmatpush.msra.mxu0 0.0
    %130 = vmatpush.msra.mxu0 0.0
    %131 = vmatpush.msra.mxu0 0.0
    %v132 = vand.u32 %v45, 4294901760
    %v133 = vsub.f32 %v45, %v132
    %134 = vmatpush.msra.mxu0 %v133
    %v135 = vand.u32 %v44, 4294901760
    %v136 = vsub.f32 %v44, %v135
    %137 = vmatpush.msra.mxu0 %v136
    %v138 = vand.u32 %v43, 4294901760
    %v139 = vsub.f32 %v43, %v138
    %140 = vmatpush.msra.mxu0 %v139
    %v141 = vand.u32 %v42, 4294901760
    %v142 = vsub.f32 %v42, %v141
    %143 = vmatpush.msra.mxu0 %v142
    %v144 = vand.u32 %v48, 4294901760
    %v145 = vsub.f32 %v48, %v144
    %146 = vmatmul.f32.gmra.mxu0 %v145
    %v147 = vpop.f32.mrf.mxu0
    %v148 = vadd.f32 %v118, %v147
    %149 = vdwg.mxu0
    %150 = vmatpush.msra.mxu0 0.0
    %151 = vmatpush.msra.mxu0 0.0
    %152 = vmatpush.msra.mxu0 0.0
    %153 = vmatpush.msra.mxu0 0.0
    %154 = vmatpush.msra.mxu0 0.0
    %155 = vmatpush.msra.mxu0 0.0
    %156 = vmatpush.msra.mxu0 0.0
    %157 = vmatpush.msra.mxu0 0.0
    %158 = vmatpush.msra.mxu0 0.0
    %159 = vmatpush.msra.mxu0 0.0
    %160 = vmatpush.msra.mxu0 0.0
    %161 = vmatpush.msra.mxu0 0.0
    %v162 = vand.u32 %v45, 4294901760
    %163 = vmatpush.msra.mxu0 %v162
    %v164 = vand.u32 %v44, 4294901760
    %165 = vmatpush.msra.mxu0 %v164
    %v166 = vand.u32 %v43, 4294901760
    %167 = vmatpush.msra.mxu0 %v166
    %v168 = vand.u32 %v42, 4294901760
    %169 = vmatpush.msra.mxu0 %v168
    %v170 = vand.u32 %v48, 4294901760
    %v171 = vsub.f32 %v48, %v170
    %v172 = vand.u32 %v171, 4294901760
    %173 = vmatmul.f32.gmra.mxu0 %v172
    %v174 = vpop.f32.mrf.mxu0
    %v175 = vadd.f32 %v148, %v174
    %176 = vdwg.mxu0
    %177 = vmatpush.msra.mxu0 0.0
    %178 = vmatpush.msra.mxu0 0.0
    %179 = vmatpush.msra.mxu0 0.0
    %180 = vmatpush.msra.mxu0 0.0
    %181 = vmatpush.msra.mxu0 0.0
    %182 = vmatpush.msra.mxu0 0.0
    %183 = vmatpush.msra.mxu0 0.0
    %184 = vmatpush.msra.mxu0 0.0
    %185 = vmatpush.msra.mxu0 0.0
    %186 = vmatpush.msra.mxu0 0.0
    %187 = vmatpush.msra.mxu0 0.0
    %188 = vmatpush.msra.mxu0 0.0
    %v189 = vand.u32 %v45, 4294901760
    %v190 = vsub.f32 %v45, %v189
    %v191 = vand.u32 %v190, 4294901760
    %192 = vmatpush.msra.mxu0 %v191
    %v193 = vand.u32 %v44, 4294901760
    %v194 = vsub.f32 %v44, %v193
    %v195 = vand.u32 %v194, 4294901760
    %196 = vmatpush.msra.mxu0 %v195
    %v197 = vand.u32 %v43, 4294901760
    %v198 = vsub.f32 %v43, %v197
    %v199 = vand.u32 %v198, 4294901760
    %200 = vmatpush.msra.mxu0 %v199
    %v201 = vand.u32 %v42, 4294901760
    %v202 = vsub.f32 %v42, %v201
    %v203 = vand.u32 %v202, 4294901760
    %204 = vmatpush.msra.mxu0 %v203
    %v205 = vand.u32 %v48, 4294901760
    %206 = vmatmul.f32.gmra.mxu0 %v205
    %v207 = vpop.f32.mrf.mxu0
    %v208 = vadd.f32 %v175, %v207
    %209 = vdwg.mxu0
    %210 = vmatpush.msra.mxu0 0.0
    %211 = vmatpush.msra.mxu0 0.0
    %212 = vmatpush.msra.mxu0 0.0
    %213 = vmatpush.msra.mxu0 0.0
    %214 = vmatpush.msra.mxu0 0.0
    %215 = vmatpush.msra.mxu0 0.0
    %216 = vmatpush.msra.mxu0 0.0
    %217 = vmatpush.msra.mxu0 0.0
    %218 = vmatpush.msra.mxu0 0.0
    %219 = vmatpush.msra.mxu0 0.0
    %220 = vmatpush.msra.mxu0 0.0
    %221 = vmatpush.msra.mxu0 0.0
    %v222 = vand.u32 %v45, 4294901760
    %223 = vmatpush.msra.mxu0 %v222
    %v224 = vand.u32 %v44, 4294901760
    %225 = vmatpush.msra.mxu0 %v224
    %v226 = vand.u32 %v43, 4294901760
    %227 = vmatpush.msra.mxu0 %v226
    %v228 = vand.u32 %v42, 4294901760
    %229 = vmatpush.msra.mxu0 %v228
    %v230 = vand.u32 %v48, 4294901760
    %231 = vmatmul.f32.gmra.mxu0 %v230
    %v232 = vpop.f32.mrf.mxu0
    %v233 = vadd.f32 %v208, %v232
    %234 = vdwg.mxu0
    %v235 = vmul.f32 %v233, 2.0
    %s236 = smul.u32 0, 128
    %v237 = vlaneseq
    %v238 = vand.u32 %v237, 127
    %v239 = vstv %s236
    %v240 = vadd.s32 %v239, %v238
    %vm241 = vcmp.lt.s32.totalorder %v240, 4
    %v242 = vsel %vm241, 0.0, -1e+30
    %v243 = vadd.f32 %v235, %v242
    %v244 = vld [vmem:[%s0] sm:$0xff]
    %v245 = vld [vmem:[#allocation4] sm:$0xff]
    %246 = vset.pattern.permute.xlu0 0
    %247 = vperm.xlu0 %246, %v244
    %v248 = vpop.permute.xlu0 %247
    %vm249 = vcmp.eq.s32.totalorder %v240, %v248
    %v250 = vsel %vm249, %v243, 0.0
    %251 = vadd.xlane.f32.xlu0 %v250
    %v252 = vpop.xlane.xlu0 %251
    %v253 = vadd.f32 %v245, %v252
    %vm254 = vcmask 7168
    %255 = vst.msk [vmem:[#allocation4] sm:$0xff] %vm254, %v253
    %v256 = vld [vmem:[#allocation2] sm:$0xff]
    %257 = vmax.xlane.f32.xlu0 %v243
    %v258 = vpop.xlane.xlu0 %257
    %v259 = vmax.f32 %v256, %v258
    %v260 = vsub.f32 %v256, %v259
    %v261 = vmul.f32 %v260, 1.442695
    %v262 = vpow.pop %v261
    %v263 = vld [vmem:[#allocation3] sm:$0xff]
    %v264 = vmul.f32 %v262, %v263
    %266 = vset.pattern.permute.xlu0 0
    %267 = vperm.xlu0 %266, %v259
    %v268 = vpop.permute.xlu0 %267
    %v270 = vsub.f32 %v243, %v268
    %v271 = vmul.f32 %v270, 1.442695
    %v272 = vpow.pop %v271
    %273 = vadd.xlane.f32.xlu0 %v272
    %v274 = vpop.xlane.xlu0 %273
    %v275 = vadd.f32 %v264, %v274
    %276 = vst.msk [vmem:[#allocation3] sm:$0xff] %vm254, %v275
    %277 = vst.msk [vmem:[#allocation2] sm:$0xff] %vm254, %v259
    // Predicated region
    $region22: #{tpu_custom_call.1} parent=1 // pred_check
      %p278 = pneg %p31
    $region23: #{tpu_custom_call.1} parent=1 // pred_check_branch
      %280 = sbr.rel (%p278) target = $region25
    $region24: #{tpu_custom_call.1} parent=1 // pred_region
      %v281 = vld [vmem:[#allocation2] sm:$0xff]
      %v282 = vld [vmem:[#allocation3] sm:$0xff]
      %v283 = vlog2.pop %v282
      %v284 = vmul.f32 %v283, 0.6931472
      %v285 = vadd.f32 %v281, %v284
      %v286 = vld [vmem:[#allocation4] sm:$0xff]
      %v287 = vsub.f32 %v285, %v286
      %v288 = vsel %vm254, %v287, 0.0
      %289 = vadd.xlane.f32.xlu0 %v288
      %v290 = vpop.xlane.xlu0 %289
      %v291 = vrot.slane %v290, 4
      %v292 = vadd.f32 %v290, %v291
      %v293 = vrot.slane %v292, 2
      %v294 = vadd.f32 %v292, %v293
      %v295 = vrot.slane %v294, 1
      %v296 = vadd.f32 %v294, %v295
      %s297 = vtos %v296
      %s298 = scalar_lea.smem [#allocation8], 0
      %299 = sst [smem:[%s298]] %s297
    $region25: #{tpu_custom_call.1} parent=1 // pred_fallthru
      _
    // Predicated region
    $region26: #{tpu_custom_call.1} parent=1 // pred_check
      _
    $region27: #{tpu_custom_call.1} parent=1 // pred_check_branch
      %301 = sbr.rel (0) target = $region29
    $region28: #{tpu_custom_call.1} parent=1 // pred_region
      %303 = vsyncadd [#allocation7], 0
      %s305 = sshll.u32 %s3, 4
      %s306 = int_to_ptr.hbm [resolvable:$true] %s305
      %308 = dma.smem_to_hbm [#allocation8], 16, %s306, [#allocation7]
    $region29: #{tpu_custom_call.1} parent=1 // pred_fallthru
      _
    // Predicated region
    $region30: #{tpu_custom_call.1} parent=1 // pred_check
      _
    $region31: #{tpu_custom_call.1} parent=1 // pred_check_branch
      %310 = sbr.rel (0) target = $region33
    $region32: #{tpu_custom_call.1} parent=1 // pred_region
      %312 = dma.done [#allocation7], 16
    $region33: #{tpu_custom_call.1} parent=1 // pred_fallthru
      _
    %313 = sfence
    %314 = vsyncpa [#allocation6], 1
    %315 = vsyncpa [#allocation7], 1

</llo_original>
